<compile_context>
chip_gen: v7x
topology: tpu7x:2x2x1
jax: 0.10.0
libtpu: 0.0.40
codegen_flags: <defaults>
</compile_context>

<pallas_src>
import functools

import jax
import jax.numpy as jnp
from jax.experimental import pallas as pl
from jax.experimental.pallas import tpu as pltpu

LANE = 128
MAX_TM = 2048          # sweep 1024/2048/4096; 2048 is safe on v5e/v6e/v7x
VMEM_INPUT_BUDGET = 12 * 1024 * 1024   # keep double-buffered inputs under this


def _make_kernel(k):
    """Kernel over a 1-D row-block grid; computes per-stream squared-error sums.

    args = (pred_0..pred_{k-1}, ref_img, gt, out, acc)
      out: SMEM (k+1,) f32  -> [sum((pred_j-gt)^2) for j] + [sum((ref-gt)^2)]
      acc: VMEM (k+1, 8, LANE) f32 per-lane partial sums (resident across grid)
    """

    def kernel(*args):
        pred_refs = args[:k]
        ref_ref = args[k]
        gt_ref = args[k + 1]
        out_ref = args[k + 2]
        acc = args[k + 3]

        i = pl.program_id(0)

        @pl.when(i == 0)
        def _init():
            acc[...] = jnp.zeros_like(acc)

        gt = gt_ref[...].astype(jnp.float32)

        # ref-gt term: computed once per row block (shared across all preds).
        d_ref = ref_ref[...].astype(jnp.float32) - gt
        acc[k] += (d_ref * d_ref).reshape(-1, 8, LANE).sum(axis=0)

        # one pass per intermediate prediction; gt tile reused from VMEM.
        for jj in range(k):
            d = pred_refs[jj][...].astype(jnp.float32) - gt
            acc[jj] += (d * d).reshape(-1, 8, LANE).sum(axis=0)

        @pl.when(i == pl.num_programs(0) - 1)
        def _finalize():
            for jj in range(k + 1):
                out_ref[jj] = jnp.sum(acc[jj])

    return kernel


def _pick_tm(rows, n_streams, itemsize):
    """Largest tile height (multiple of 8, <= MAX_TM) within the VMEM budget."""
    cap = VMEM_INPUT_BUDGET // (n_streams * 2 * LANE * itemsize)
    cap = max(8, min(MAX_TM, (cap // 8) * 8))
    rows8 = -(-rows // 8) * 8
    return min(cap, rows8)


@jax.jit
def _sequence_mse_gt_diff(ref_img, gt, *pred_list):
    """Returns a (k,) array: MSE(pred_j, gt) - MSE(ref_img, gt) for each pred."""
    k = len(pred_list)
    n = gt.size
    itemsize = max([p.dtype.itemsize for p in pred_list]
                   + [ref_img.dtype.itemsize, gt.dtype.itemsize])

    rows = -(-n // LANE)
    tm = _pick_tm(rows, k + 2, itemsize)
    rows_p = -(-rows // tm) * tm
    pad = rows_p * LANE - n

    def slab(x):
        # Flatten row-major; native dtype; pad only the ragged tail with zeros
        # (zeros contribute 0 to every squared-error sum).
        flat = x.reshape(-1)
        if pad:
            flat = jnp.pad(flat, (0, pad))
        return flat.reshape(rows_p, LANE)

    slabs = [slab(p) for p in pred_list] + [slab(ref_img), slab(gt)]

    kernel = _make_kernel(k)
    in_specs = [pl.BlockSpec((tm, LANE), lambda i: (i, 0)) for _ in range(k + 2)]

    sums = pl.pallas_call(
        kernel,
        out_shape=jax.ShapeDtypeStruct((k + 1,), jnp.float32),
        grid_spec=pltpu.PrefetchScalarGridSpec(
            num_scalar_prefetch=0,
            grid=(rows_p // tm,),
            in_specs=in_specs,
            out_specs=pl.BlockSpec(memory_space=pltpu.MemorySpace.SMEM),
            scratch_shapes=[pltpu.VMEM((k + 1, 8, LANE), jnp.float32)],
        ),
        compiler_params=pltpu.CompilerParams(
            dimension_semantics=("arbitrary",)),
        cost_estimate=pl.CostEstimate(
            flops=3 * (k + 1) * rows_p * LANE,
            transcendentals=0,
            bytes_accessed=(k + 2) * rows_p * LANE * itemsize + (k + 1) * 4,
        ),
    )(*slabs)

    inv_n = jnp.float32(1.0 / float(n))
    ref_mse = sums[k] * inv_n
    return sums[:k] * inv_n - ref_mse


def mse_sequence_loss_gt_diff_forward(inputs, outputs, mode="train"):
    """JAX/Pallas equivalent of Mse_sequence_loss_gt_diff.forward."""
    loss_dict_dev = {}
    seqs = outputs["rgb"]
    if not isinstance(seqs, list):
        seqs = [[seqs]]

    loss_terms = []
    for sequence_id, pred_rgb_list in enumerate(seqs):
        gt_image = inputs["rgb"][:, 2 + sequence_id]
        ref_image = inputs["rgb"][:, 1 + sequence_id]
        # One fused kernel per sequence streams gt/ref once for all preds.
        per_pred = _sequence_mse_gt_diff(ref_image, gt_image, *pred_rgb_list)
        for intermidiate_id in range(len(pred_rgb_list)):
            inverse_intermidiate_id = len(pred_rgb_list) - intermidiate_id - 1
            key = "additional_info_{}/mse_t{}_module_index_{}_gtdiff".format(
                mode, 2 + sequence_id, inverse_intermidiate_id)
            loss_dict_dev[key] = per_pred[intermidiate_id]
            loss_terms.append(per_pred[intermidiate_id])

    total = jnp.stack(loss_terms).mean()
    loss_dict_dev["{}/mse_gt_diff".format(mode)] = total

    # Single device->host transfer for the whole dict (no per-prediction sync).
    host = jax.device_get(loss_dict_dev)
    loss_dict = {key: float(val) for key, val in host.items()}
    return jnp.array(0, dtype=jnp.int32), loss_dict


def _reference(inputs, outputs):
    """Pure-jnp reference for correctness checking."""
    seqs = outputs["rgb"]
    if not isinstance(seqs, list):
        seqs = [[seqs]]
    losses = []
    for sid, preds in enumerate(seqs):
        gt = inputs["rgb"][:, 2 + sid].astype(jnp.float32)
        ref = inputs["rgb"][:, 1 + sid].astype(jnp.float32)
        for pred in preds:
            losses.append(jnp.mean((pred.astype(jnp.float32) - gt) ** 2)
                          - jnp.mean((ref - gt) ** 2))
    total = sum(losses) / len(losses)
    return losses, total


if __name__ == "__main__":
    key = jax.random.PRNGKey(0)
    B, T, C, H, W = 2, 4, 3, 16, 16  # inputs['rgb']: [B, T, C, H, W]

    k0, k1, k2, k3 = jax.random.split(key, 4)
    inputs = {"rgb": jax.random.uniform(k0, (B, T, C, H, W), jnp.float32)}
    # outputs['rgb']: list (per sequence) of lists (per intermediate module) of [B,C,H,W]
    outputs = {
        "rgb": [
            [jax.random.uniform(k1, (B, C, H, W), jnp.float32),
             jax.random.uniform(k2, (B, C, H, W), jnp.float32)],
            [jax.random.uniform(k3, (B, C, H, W), jnp.float32)],
        ]
    }

    zero, loss_dict = mse_sequence_loss_gt_diff_forward(inputs, outputs, mode="train")
    jax.block_until_ready(zero)

    ref_losses, ref_total = _reference(inputs, outputs)
    ref_losses = [float(x) for x in jax.device_get(ref_losses)]
    ref_total = float(jax.device_get(ref_total))

    # check total
    got_total = loss_dict["train/mse_gt_diff"]
    assert abs(got_total - ref_total) < 1e-5, (got_total, ref_total)

    # check every per-prediction entry
    idx = 0
    for sid, preds in enumerate(outputs["rgb"]):
        for iid in range(len(preds)):
            inv = len(preds) - iid - 1
            k = "additional_info_train/mse_t{}_module_index_{}_gtdiff".format(2 + sid, inv)
            assert abs(loss_dict[k] - ref_losses[idx]) < 1e-5, (k, loss_dict[k], ref_losses[idx])
            idx += 1

    print("KERNEL_OK")
</pallas_src>

<mosaic_0001>
module attributes {stable_mosaic.version = 11 : i64} {
  func.func @kernel(%arg0: i32, %arg1: memref<16x128xf32, #tpu.memory_space<vmem>>, %arg2: memref<16x128xf32, #tpu.memory_space<vmem>>, %arg3: memref<16x128xf32, #tpu.memory_space<vmem>>, %arg4: memref<16x128xf32, #tpu.memory_space<vmem>>, %arg5: memref<3xf32, #tpu.memory_space<smem>>, %arg6: memref<3x8x128xf32, #tpu.memory_space<vmem>>) attributes {dimension_semantics = [#tpu.dimension_semantics<arbitrary>], iteration_bounds = array<i64: 1>, scalar_prefetch = 0 : i64, scratch_operands = 1 : i64, tpu.core_type = #tpu.core_type<tc>, window_params = [{transform_indices = @transform_0, window_bounds = array<i64: 16, 128>}, {transform_indices = @transform_1, window_bounds = array<i64: 16, 128>}, {transform_indices = @transform_2, window_bounds = array<i64: 16, 128>}, {transform_indices = @transform_3, window_bounds = array<i64: 16, 128>}, {transform_indices = @transform_4, window_bounds = array<i64: 3>}]} {
    %c0_i32 = arith.constant 0 : i32
    %0 = arith.cmpi eq, %arg0, %c0_i32 : i32
    %1 = arith.extui %0 : i1 to i32
    %c0_i32_0 = arith.constant 0 : i32
    %2 = arith.cmpi ne, %1, %c0_i32_0 : i32
    scf.if %2 {
      %cst_28 = arith.constant 0.000000e+00 : f32
      %40 = vector.broadcast %cst_28 : f32 to vector<3x8x128xf32>
      %c0_29 = arith.constant 0 : index
      %c0_30 = arith.constant 0 : index
      %c0_31 = arith.constant 0 : index
      %41 = vector.load %arg6[%c0_29, %c0_30, %c0_31] : memref<3x8x128xf32, #tpu.memory_space<vmem>>, vector<3x8x128xf32>
      tpu.vector_store %arg6[%c0_29, %c0_30, %c0_31], %40 {strides = array<i32>} : memref<3x8x128xf32, #tpu.memory_space<vmem>>, vector<3x8x128xf32>,
    } else {
    }
    %c0 = arith.constant 0 : index
    %c0_1 = arith.constant 0 : index
    %3 = vector.load %arg4[%c0, %c0_1] : memref<16x128xf32, #tpu.memory_space<vmem>>, vector<16x128xf32>
    %c0_2 = arith.constant 0 : index
    %c0_3 = arith.constant 0 : index
    %4 = vector.load %arg3[%c0_2, %c0_3] : memref<16x128xf32, #tpu.memory_space<vmem>>, vector<16x128xf32>
    %5 = arith.subf %4, %3 : vector<16x128xf32>
    %c2 = arith.constant 2 : index
    %c0_4 = arith.constant 0 : index
    %c0_5 = arith.constant 0 : index
    %6 = vector.load %arg6[%c2, %c0_4, %c0_5] : memref<3x8x128xf32, #tpu.memory_space<vmem>>, vector<1x8x128xf32>
    %7 = vector.shape_cast %6 : vector<1x8x128xf32> to vector<8x128xf32>
    %8 = arith.mulf %5, %5 : vector<16x128xf32>
    %9 = vector.shape_cast %8 : vector<16x128xf32> to vector<2x8x128xf32>
    %cst = arith.constant dense<0.000000e+00> : vector<8x128xf32>
    %10 = vector.multi_reduction <add>, %9, %cst [0] : vector<2x8x128xf32> to vector<8x128xf32>
    %11 = arith.addf %7, %10 : vector<8x128xf32>
    %c2_6 = arith.constant 2 : index
    %c0_7 = arith.constant 0 : index
    %c0_8 = arith.constant 0 : index
    %12 = vector.load %arg6[%c2_6, %c0_7, %c0_8] : memref<3x8x128xf32, #tpu.memory_space<vmem>>, vector<1x8x128xf32>
    %13 = vector.shape_cast %12 : vector<1x8x128xf32> to vector<8x128xf32>
    %14 = vector.shape_cast %11 : vector<8x128xf32> to vector<1x8x128xf32>
    tpu.vector_store %arg6[%c2_6, %c0_7, %c0_8], %14 {strides = array<i32>} : memref<3x8x128xf32, #tpu.memory_space<vmem>>, vector<1x8x128xf32>,
    %c0_9 = arith.constant 0 : index
    %c0_10 = arith.constant 0 : index
    %15 = vector.load %arg1[%c0_9, %c0_10] : memref<16x128xf32, #tpu.memory_space<vmem>>, vector<16x128xf32>
    %16 = arith.subf %15, %3 : vector<16x128xf32>
    %c0_11 = arith.constant 0 : index
    %c0_12 = arith.constant 0 : index
    %c0_13 = arith.constant 0 : index
    %17 = vector.load %arg6[%c0_11, %c0_12, %c0_13] : memref<3x8x128xf32, #tpu.memory_space<vmem>>, vector<1x8x128xf32>
    %18 = vector.shape_cast %17 : vector<1x8x128xf32> to vector<8x128xf32>
    %19 = arith.mulf %16, %16 : vector<16x128xf32>
    %20 = vector.shape_cast %19 : vector<16x128xf32> to vector<2x8x128xf32>
    %cst_14 = arith.constant dense<0.000000e+00> : vector<8x128xf32>
    %21 = vector.multi_reduction <add>, %20, %cst_14 [0] : vector<2x8x128xf32> to vector<8x128xf32>
    %22 = arith.addf %18, %21 : vector<8x128xf32>
    %c0_15 = arith.constant 0 : index
    %c0_16 = arith.constant 0 : index
    %c0_17 = arith.constant 0 : index
    %23 = vector.load %arg6[%c0_15, %c0_16, %c0_17] : memref<3x8x128xf32, #tpu.memory_space<vmem>>, vector<1x8x128xf32>
    %24 = vector.shape_cast %23 : vector<1x8x128xf32> to vector<8x128xf32>
    %25 = vector.shape_cast %22 : vector<8x128xf32> to vector<1x8x128xf32>
    tpu.vector_store %arg6[%c0_15, %c0_16, %c0_17], %25 {strides = array<i32>} : memref<3x8x128xf32, #tpu.memory_space<vmem>>, vector<1x8x128xf32>,
    %c0_18 = arith.constant 0 : index
    %c0_19 = arith.constant 0 : index
    %26 = vector.load %arg2[%c0_18, %c0_19] : memref<16x128xf32, #tpu.memory_space<vmem>>, vector<16x128xf32>
    %27 = arith.subf %26, %3 : vector<16x128xf32>
    %c1 = arith.constant 1 : index
    %c0_20 = arith.constant 0 : index
    %c0_21 = arith.constant 0 : index
    %28 = vector.load %arg6[%c1, %c0_20, %c0_21] : memref<3x8x128xf32, #tpu.memory_space<vmem>>, vector<1x8x128xf32>
    %29 = vector.shape_cast %28 : vector<1x8x128xf32> to vector<8x128xf32>
    %30 = arith.mulf %27, %27 : vector<16x128xf32>
    %31 = vector.shape_cast %30 : vector<16x128xf32> to vector<2x8x128xf32>
    %cst_22 = arith.constant dense<0.000000e+00> : vector<8x128xf32>
    %32 = vector.multi_reduction <add>, %31, %cst_22 [0] : vector<2x8x128xf32> to vector<8x128xf32>
    %33 = arith.addf %29, %32 : vector<8x128xf32>
    %c1_23 = arith.constant 1 : index
    %c0_24 = arith.constant 0 : index
    %c0_25 = arith.constant 0 : index
    %34 = vector.load %arg6[%c1_23, %c0_24, %c0_25] : memref<3x8x128xf32, #tpu.memory_space<vmem>>, vector<1x8x128xf32>
    %35 = vector.shape_cast %34 : vector<1x8x128xf32> to vector<8x128xf32>
    %36 = vector.shape_cast %33 : vector<8x128xf32> to vector<1x8x128xf32>
    tpu.vector_store %arg6[%c1_23, %c0_24, %c0_25], %36 {strides = array<i32>} : memref<3x8x128xf32, #tpu.memory_space<vmem>>, vector<1x8x128xf32>,
    %c0_i32_26 = arith.constant 0 : i32
    %37 = arith.cmpi eq, %arg0, %c0_i32_26 : i32
    %38 = arith.extui %37 : i1 to i32
    %c0_i32_27 = arith.constant 0 : i32
    %39 = arith.cmpi ne, %38, %c0_i32_27 : i32
    scf.if %39 {
      %c0_28 = arith.constant 0 : index
      %c0_29 = arith.constant 0 : index
      %c0_30 = arith.constant 0 : index
      %40 = vector.load %arg6[%c0_28, %c0_29, %c0_30] : memref<3x8x128xf32, #tpu.memory_space<vmem>>, vector<1x8x128xf32>
      %41 = vector.shape_cast %40 : vector<1x8x128xf32> to vector<8x128xf32>
      %42 = vector.shape_cast %41 : vector<8x128xf32> to vector<1x8x128xf32>
      %cst_31 = arith.constant dense<0.000000e+00> : vector<1xf32>
      %43 = vector.multi_reduction <add>, %42, %cst_31 [1, 2] : vector<1x8x128xf32> to vector<1xf32>
      %44 = vector.shape_cast %43 : vector<1xf32> to vector<1x1x1xf32>
      %45 = vector.extract %44[0, 0, 0] : f32 from vector<1x1x1xf32>
      %c0_32 = arith.constant 0 : index
      %46 = memref.load %arg5[%c0_32] : memref<3xf32, #tpu.memory_space<smem>>
      memref.store %45, %arg5[%c0_32] : memref<3xf32, #tpu.memory_space<smem>>
      %c1_33 = arith.constant 1 : index
      %c0_34 = arith.constant 0 : index
      %c0_35 = arith.constant 0 : index
      %47 = vector.load %arg6[%c1_33, %c0_34, %c0_35] : memref<3x8x128xf32, #tpu.memory_space<vmem>>, vector<1x8x128xf32>
      %48 = vector.shape_cast %47 : vector<1x8x128xf32> to vector<8x128xf32>
      %49 = vector.shape_cast %48 : vector<8x128xf32> to vector<1x8x128xf32>
      %cst_36 = arith.constant dense<0.000000e+00> : vector<1xf32>
      %50 = vector.multi_reduction <add>, %49, %cst_36 [1, 2] : vector<1x8x128xf32> to vector<1xf32>
      %51 = vector.shape_cast %50 : vector<1xf32> to vector<1x1x1xf32>
      %52 = vector.extract %51[0, 0, 0] : f32 from vector<1x1x1xf32>
      %c1_37 = arith.constant 1 : index
      %53 = memref.load %arg5[%c1_37] : memref<3xf32, #tpu.memory_space<smem>>
      memref.store %52, %arg5[%c1_37] : memref<3xf32, #tpu.memory_space<smem>>
      %c2_38 = arith.constant 2 : index
      %c0_39 = arith.constant 0 : index
      %c0_40 = arith.constant 0 : index
      %54 = vector.load %arg6[%c2_38, %c0_39, %c0_40] : memref<3x8x128xf32, #tpu.memory_space<vmem>>, vector<1x8x128xf32>
      %55 = vector.shape_cast %54 : vector<1x8x128xf32> to vector<8x128xf32>
      %56 = vector.shape_cast %55 : vector<8x128xf32> to vector<1x8x128xf32>
      %cst_41 = arith.constant dense<0.000000e+00> : vector<1xf32>
      %57 = vector.multi_reduction <add>, %56, %cst_41 [1, 2] : vector<1x8x128xf32> to vector<1xf32>
      %58 = vector.shape_cast %57 : vector<1xf32> to vector<1x1x1xf32>
      %59 = vector.extract %58[0, 0, 0] : f32 from vector<1x1x1xf32>
      %c2_42 = arith.constant 2 : index
      %60 = memref.load %arg5[%c2_42] : memref<3xf32, #tpu.memory_space<smem>>
      memref.store %59, %arg5[%c2_42] : memref<3xf32, #tpu.memory_space<smem>>
    } else {
    }
    return
  }
  func.func @transform_0(%arg0: i32) -> (i32, i32) {
    %c0_i32 = arith.constant 0 : i32
    %c0_i32_0 = arith.constant 0 : i32
    return %arg0, %c0_i32 : i32, i32
  }
  func.func @transform_1(%arg0: i32) -> (i32, i32) {
    %c0_i32 = arith.constant 0 : i32
    %c0_i32_0 = arith.constant 0 : i32
    return %arg0, %c0_i32 : i32, i32
  }
  func.func @transform_2(%arg0: i32) -> (i32, i32) {
    %c0_i32 = arith.constant 0 : i32
    %c0_i32_0 = arith.constant 0 : i32
    return %arg0, %c0_i32 : i32, i32
  }
  func.func @transform_3(%arg0: i32) -> (i32, i32) {
    %c0_i32 = arith.constant 0 : i32
    %c0_i32_0 = arith.constant 0 : i32
    return %arg0, %c0_i32 : i32, i32
  }
  func.func @transform_4(%arg0: i32) -> i32 {
    %c0_i32 = arith.constant 0 : i32
    %c0_i32_0 = arith.constant 0 : i32
    return %c0_i32 : i32
  }
}

</mosaic_0001>

<llo_original>
// kernel: _sequence_mse_gt_diff.1
$region0: #{_sequence_mse_gt_diff.1}
  #allocation0 [shape = 'u32[]', space=smem, size = 0x4, offset = 0x4, fixed_abs, tag = 'smem constant byte address 0x4 - core index']
  #allocation1 [shape = 'u32[144,128]{1,0:T(1,128)}', space=vmem, size = 0x12000, scoped, tag = 'internal scratch']
  #allocation2 [shape = 'f32[3,8,128]{2,1,0:T(8,128)}', space=vmem, size = 0x3000, scoped, tag = 'scratch operand']
  %s0 = inlined_call_operand.vmem [shape: f32[16,128], index: 0, kind: input, shape index: {}]
  %s1 = inlined_call_operand.vmem [shape: f32[16,128], index: 1, kind: input, shape index: {}]
  %s2 = inlined_call_operand.vmem [shape: f32[16,128], index: 2, kind: input, shape index: {}]
  %s3 = inlined_call_operand.vmem [shape: f32[16,128], index: 3, kind: input, shape index: {}]
  %s4 = inlined_call_operand.vmem [shape: f32[3], index: 4, kind: output, shape index: {}]
  %s5 = sld [smem:[#allocation0]]
  $region34: #{_sequence_mse_gt_diff.1} parent=0
    _
  %s7 = ssub.s32 1, %s5
  %s8 = scalar_select 0, %s7, %s5
  $region1: #{_sequence_mse_gt_diff.1} parent=0
    #allocation3 [shape = 'u8[512]{0}', space=smem, size = 0x200, scoped, tag = 'output window, operand 0, single buffered']
    #allocation4 [shape = 's32[1]{0}', space=sflag, size = 0x4, scoped, tag = 'scoped memory for _sequence_mse_gt_diff.1']
    %9 = vsyncpa [#allocation4], 0
    // Predicated region
    $region2: #{_sequence_mse_gt_diff.1} parent=1 // pred_check
      _
    $region3: #{_sequence_mse_gt_diff.1} parent=1 // pred_check_branch
      %11 = sbr.rel (0) target = $region5
    $region4: #{_sequence_mse_gt_diff.1} parent=1 // pred_region
      _
    $region5: #{_sequence_mse_gt_diff.1} parent=1 // pred_fallthru
      _
    // Predicated region
    $region6: #{_sequence_mse_gt_diff.1} parent=1 // pred_check
      _
    $region7: #{_sequence_mse_gt_diff.1} parent=1 // pred_check_branch
      %13 = sbr.rel (0) target = $region9
    $region8: #{_sequence_mse_gt_diff.1} parent=1 // pred_region
      _
    $region9: #{_sequence_mse_gt_diff.1} parent=1 // pred_fallthru
      _
    // Predicated region
    $region10: #{_sequence_mse_gt_diff.1} parent=1 // pred_check
      _
    $region11: #{_sequence_mse_gt_diff.1} parent=1 // pred_check_branch
      %15 = sbr.rel (0) target = $region13
    $region12: #{_sequence_mse_gt_diff.1} parent=1 // pred_region
      _
    $region13: #{_sequence_mse_gt_diff.1} parent=1 // pred_fallthru
      _
    // Predicated region
    $region14: #{_sequence_mse_gt_diff.1} parent=1 // pred_check
      _
    $region15: #{_sequence_mse_gt_diff.1} parent=1 // pred_check_branch
      %17 = sbr.rel (0) target = $region17
    $region16: #{_sequence_mse_gt_diff.1} parent=1 // pred_region
      _
    $region17: #{_sequence_mse_gt_diff.1} parent=1 // pred_fallthru
      _
    %p18 = scmp.eq.s32.totalorder 0, 0
    // Predicated region
    $region18: #{_sequence_mse_gt_diff.1} parent=1 // pred_check
      %p19 = pneg %p18
    $region19: #{_sequence_mse_gt_diff.1} parent=1 // pred_check_branch
      %21 = sbr.rel (%p19) target = $region21
    $region20: #{_sequence_mse_gt_diff.1} parent=1 // pred_region
      %22 = vst [vmem:[#allocation2] sm:$0xff] 0.0
      %23 = vst [vmem:[#allocation2 + $0x8] sm:$0xff] 0.0
      %24 = vst [vmem:[#allocation2 + $0x10] sm:$0xff] 0.0
    $region21: #{_sequence_mse_gt_diff.1} parent=1 // pred_fallthru
      _
    %v25 = vld [vmem:[%s3] sm:$0xff]
    %v26 = vld [vmem:[%s3 + $0x8] sm:$0xff]
    %v27 = vld [vmem:[%s2] sm:$0xff]
    %v28 = vld [vmem:[%s2 + $0x8] sm:$0xff]
    %v29 = vsub.f32 %v27, %v25
    %v30 = vsub.f32 %v28, %v26
    %s31 = scalar_lea.vmem [#allocation2], 16
    %v32 = vld [vmem:[%s31] sm:$0xff]
    %v33 = vmul.f32 %v29, %v29
    %v34 = vmul.f32 %v30, %v30
    %v35 = vadd.f32 %v33, %v34
    %v36 = vadd.f32 %v32, %v35
    %37 = vst [vmem:[%s31] sm:$0xff] %v36
    %v38 = vld [vmem:[%s0] sm:$0xff]
    %v39 = vld [vmem:[%s0 + $0x8] sm:$0xff]
    %v40 = vsub.f32 %v38, %v25
    %v41 = vsub.f32 %v39, %v26
    %v42 = vld [vmem:[#allocation2] sm:$0xff]
    %v43 = vmul.f32 %v40, %v40
    %v44 = vmul.f32 %v41, %v41
    %v45 = vadd.f32 %v43, %v44
    %v46 = vadd.f32 %v42, %v45
    %47 = vst [vmem:[#allocation2] sm:$0xff] %v46
    %v48 = vld [vmem:[%s1] sm:$0xff]
    %v49 = vld [vmem:[%s1 + $0x8] sm:$0xff]
    %v50 = vsub.f32 %v48, %v25
    %v51 = vsub.f32 %v49, %v26
    %s52 = scalar_lea.vmem [#allocation2], 8
    %v53 = vld [vmem:[%s52] sm:$0xff]
    %v54 = vmul.f32 %v50, %v50
    %v55 = vmul.f32 %v51, %v51
    %v56 = vadd.f32 %v54, %v55
    %v57 = vadd.f32 %v53, %v56
    %58 = vst [vmem:[%s52] sm:$0xff] %v57
    // Predicated region
    $region22: #{_sequence_mse_gt_diff.1} parent=1 // pred_check
      %p59 = pneg %p18
    $region23: #{_sequence_mse_gt_diff.1} parent=1 // pred_check_branch
      %61 = sbr.rel (%p59) target = $region25
    $region24: #{_sequence_mse_gt_diff.1} parent=1 // pred_region
      %v62 = vld [vmem:[#allocation2] sm:$0xff]
      %63 = vadd.xlane.f32.xlu0 %v62
      %v64 = vpop.xlane.xlu0 %63
      %v65 = vrot.slane %v64, 4
      %v66 = vadd.f32 %v64, %v65
      %v67 = vrot.slane %v66, 2
      %v68 = vadd.f32 %v66, %v67
      %v69 = vrot.slane %v68, 1
      %v70 = vadd.f32 %v68, %v69
      %s71 = vtos %v70
      %s72 = scalar_lea.smem [#allocation3], 0
      %73 = sst [smem:[%s72]] %s71
      %v74 = vld [vmem:[%s52] sm:$0xff]
      %75 = vadd.xlane.f32.xlu0 %v74
      %v76 = vpop.xlane.xlu0 %75
      %v77 = vrot.slane %v76, 4
      %v78 = vadd.f32 %v76, %v77
      %v79 = vrot.slane %v78, 2
      %v80 = vadd.f32 %v78, %v79
      %v81 = vrot.slane %v80, 1
      %v82 = vadd.f32 %v80, %v81
      %s83 = vtos %v82
      %s84 = scalar_lea.smem [#allocation3], 1
      %85 = sst [smem:[%s84]] %s83
      %v86 = vld [vmem:[%s31] sm:$0xff]
      %87 = vadd.xlane.f32.xlu0 %v86
      %v88 = vpop.xlane.xlu0 %87
      %v89 = vrot.slane %v88, 4
      %v90 = vadd.f32 %v88, %v89
      %v91 = vrot.slane %v90, 2
      %v92 = vadd.f32 %v90, %v91
      %v93 = vrot.slane %v92, 1
      %v94 = vadd.f32 %v92, %v93
      %s95 = vtos %v94
      %s96 = scalar_lea.smem [#allocation3], 2
      %97 = sst [smem:[%s96]] %s95
    $region25: #{_sequence_mse_gt_diff.1} parent=1 // pred_fallthru
      _
    // Predicated region
    $region26: #{_sequence_mse_gt_diff.1} parent=1 // pred_check
      _
    $region27: #{_sequence_mse_gt_diff.1} parent=1 // pred_check_branch
      %99 = sbr.rel (0) target = $region29
    $region28: #{_sequence_mse_gt_diff.1} parent=1 // pred_region
      %s101 = ssub.s32 16, 16
      %102 = vsyncadd [#allocation4], %s101
      %s104 = sshll.u32 %s4, 4
      %s105 = int_to_ptr.vmem [resolvable:$true] %s104
      %107 = dma.smem_to_vmem [#allocation3], 16, %s105, [#allocation4]
    $region29: #{_sequence_mse_gt_diff.1} parent=1 // pred_fallthru
      _
    // Predicated region
    $region30: #{_sequence_mse_gt_diff.1} parent=1 // pred_check
      _
    $region31: #{_sequence_mse_gt_diff.1} parent=1 // pred_check_branch
      %109 = sbr.rel (0) target = $region33
    $region32: #{_sequence_mse_gt_diff.1} parent=1 // pred_region
      %110 = dma.done [#allocation4], 16
    $region33: #{_sequence_mse_gt_diff.1} parent=1 // pred_fallthru
      _
    %111 = sfence
    %112 = vsyncpa [#allocation4], 1

</llo_original>
